<compile_context>
chip_gen: v6e
topology: v6e:2x2x1
jax: 0.10.0
libtpu: 0.0.40
codegen_flags: <defaults>
</compile_context>

<pallas_src>
import math

import numpy as np
import jax
import jax.numpy as jnp
from jax.experimental import pallas as pl
from jax.experimental.pallas import tpu as pltpu


# ----------------------------- Pallas kernels ------------------------------

def _ffn_gated_kernel(x_ref, wg_ref, wu_ref, bg_ref, bu_ref, wd_ref, bd_ref,
                      o_ref, acc_ref):
    """SwiGLU FFN; grid = (token tiles, hidden tiles). acc_ref: f32 (tm, E)."""
    h = pl.program_id(1)

    @pl.when(h == 0)
    def _():
        acc_ref[...] = jnp.zeros_like(acc_ref)

    x = x_ref[...]                                                     # (tm, E) compute dtype
    g = jnp.dot(x, wg_ref[...], preferred_element_type=jnp.float32) + bg_ref[...]
    u = jnp.dot(x, wu_ref[...], preferred_element_type=jnp.float32) + bu_ref[...]
    a = (g * jax.nn.sigmoid(g)) * u                                    # silu(g) * u, f32
    acc_ref[...] += jnp.dot(a.astype(wd_ref.dtype), wd_ref[...],
                            preferred_element_type=jnp.float32)

    @pl.when(h == pl.num_programs(1) - 1)
    def _():
        o_ref[...] = (acc_ref[...] + bd_ref[...]).astype(o_ref.dtype)


def _ffn_gelu_kernel(x_ref, wu_ref, bu_ref, wd_ref, bd_ref, o_ref, acc_ref):
    """Non-gated FFN: gelu(up(x), approximate='tanh') -> down."""
    h = pl.program_id(1)

    @pl.when(h == 0)
    def _():
        acc_ref[...] = jnp.zeros_like(acc_ref)

    x = x_ref[...]
    u = jnp.dot(x, wu_ref[...], preferred_element_type=jnp.float32) + bu_ref[...]
    c = math.sqrt(2.0 / math.pi)
    a = 0.5 * u * (1.0 + jnp.tanh(c * (u + 0.044715 * u * u * u)))     # tanh-approx GELU, f32
    acc_ref[...] += jnp.dot(a.astype(wd_ref.dtype), wd_ref[...],
                            preferred_element_type=jnp.float32)

    @pl.when(h == pl.num_programs(1) - 1)
    def _():
        o_ref[...] = (acc_ref[...] + bd_ref[...]).astype(o_ref.dtype)


# ------------------------- sizing / budgeting helpers ------------------------

def _round_up(x, m):
    return ((x + m - 1) // m) * m


def _round_down(x, m):
    return (x // m) * m


def _device_vmem_bytes():
    # Per-TensorCore VMEM (v5e/v6e: 128 MiB, v7x: 64 MiB). Under a "parallel" token grid,
    # each core holds its own copy of the per-step weight blocks -> budget per core.
    try:
        info = pltpu.get_tpu_info()
        cap = int(getattr(info, "vmem_capacity_bytes", 0))
        if cap > 0:
            return cap
    except Exception:
        pass
    return 64 << 20  # conservative default (v7x per-core VMEM)


def _vmem_footprint(tm, th, e_pad, csize, osize, gated):
    """Per-grid-step VMEM estimate (bytes), double-buffered pipeline blocks."""
    n_w1 = 2 if gated else 1
    buf = 2  # default Pallas double-buffering of every pipelined block
    w_blocks = buf * (n_w1 * e_pad * th + th * e_pad) * csize
    b_blocks = buf * (n_w1 * 8 * th + 8 * e_pad) * 4          # sublane-padded biases
    io_blocks = buf * tm * e_pad * (csize + osize)            # x tile + o tile
    acc = tm * e_pad * 4                                      # f32 accumulator scratch
    # intermediates: g/u (f32), a (f32), a cast to compute dtype, partial dot result (f32)
    interm = tm * th * ((n_w1 + 1) * 4 + csize) + tm * e_pad * 4
    return w_blocks + b_blocks + io_blocks + acc + interm


def _choose_hidden_tile(e_pad, h_pad0, csize, osize, budget, gated, tm_ref=256):
    cands = [h_pad0] + [t for t in (4096, 2048, 1024, 512, 256, 128) if t < h_pad0]
    fitting = [t for t in cands
               if _vmem_footprint(tm_ref, t, e_pad, csize, osize, gated) <= budget]
    if not fitting:
        return 128
    for t in fitting:           # prefer a tile that divides H exactly (no padded FLOPs)
        if h_pad0 % t == 0:
            return t
    return fitting[0]


def _choose_tm(n_tokens, th, e_pad, csize, osize, budget, gated):
    tm = 8
    for cand in (512, 256, 128, 64, 32, 16, 8):
        if _vmem_footprint(cand, th, e_pad, csize, osize, gated) <= budget:
            tm = cand
            break
    if n_tokens <= 8:
        return max(n_tokens, 1)
    tm = min(tm, max(8, _round_down(n_tokens, 8)))
    # keep >=2 token-grid steps when tokens allow (megacore / v7x 2-TC sharding)
    if tm >= n_tokens and n_tokens >= 16:
        tm = max(8, _round_up(-(-n_tokens // 2), 8))
    return tm


# ------------------------------ parameter prep -------------------------------

def prepare_ffn_params(params, *, use_gated_mlp=True, compute_dtype=jnp.bfloat16,
                       vmem_budget_bytes=None):
    """One-time weight packing: pad E/H to lane-dense multiples of 128 and cast to the
    MXU compute dtype. Picks the hidden tile `th` from a device-aware VMEM budget."""
    E, H = params["w_up"].shape
    e_pad = _round_up(E, 128)
    h_pad0 = _round_up(H, 128)
    csize = np.dtype(compute_dtype).itemsize
    osize = 4  # budget assuming f32 activations in/out (conservative)

    cap = _device_vmem_bytes()
    if vmem_budget_bytes is None:
        vmem_budget_bytes = int(0.80 * cap)

    th = _choose_hidden_tile(e_pad, h_pad0, csize, osize, vmem_budget_bytes, use_gated_mlp)
    h_pad = _round_up(H, th)  # guarantee th divides the padded hidden dim

    def pad2(w, rows, cols):
        return jnp.pad(w, ((0, rows - w.shape[0]), (0, cols - w.shape[1])))

    prep = {
        "use_gated_mlp": use_gated_mlp,
        "compute_dtype": compute_dtype,
        "E": E, "E_pad": e_pad, "H": H, "H_pad": h_pad, "th": th,
        "vmem_cap_bytes": cap, "vmem_budget_bytes": vmem_budget_bytes,
        "w_up": pad2(params["w_up"], e_pad, h_pad).astype(compute_dtype),
        "b_up": pad2(params["b_up"], 1, h_pad).astype(jnp.float32),
        "w_down": pad2(params["w_down"], h_pad, e_pad).astype(compute_dtype),
        "b_down": pad2(params["b_down"], 1, e_pad).astype(jnp.float32),
    }
    if use_gated_mlp:
        prep["w_gate"] = pad2(params["w_gate"], e_pad, h_pad).astype(compute_dtype)
        prep["b_gate"] = pad2(params["b_gate"], 1, h_pad).astype(jnp.float32)
    return prep


# --------------------------------- wrapper ------------------------------------

def feed_forward(x, prep, *, tm=None):
    """x: [B, T, E] (any float dtype). prep: output of prepare_ffn_params."""
    B, T, E = x.shape
    assert E == prep["E"], f"embed size mismatch: {E} vs {prep['E']}"
    gated = prep["use_gated_mlp"]
    e_pad, h_pad, th = prep["E_pad"], prep["H_pad"], prep["th"]
    cdt = prep["compute_dtype"]
    csize = np.dtype(cdt).itemsize
    osize = np.dtype(x.dtype).itemsize
    budget = prep["vmem_budget_bytes"]

    N = B * T
    if tm is None:
        tm = _choose_tm(N, th, e_pad, csize, osize, budget, gated)
    tm = max(1, min(tm, max(N, 1)))

    x2 = x.reshape(N, E)
    if e_pad != E:
        x2 = jnp.pad(x2, ((0, 0), (0, e_pad - E)))
    x2 = x2.astype(cdt)

    h_blocks = h_pad // th
    grid = (pl.cdiv(N, tm), h_blocks)

    tok_spec = pl.BlockSpec((tm, e_pad), lambda i, h: (i, 0))
    if gated:
        kernel = _ffn_gated_kernel
        in_specs = [
            tok_spec,                                           # x
            pl.BlockSpec((e_pad, th), lambda i, h: (0, h)),     # w_gate block
            pl.BlockSpec((e_pad, th), lambda i, h: (0, h)),     # w_up   block
            pl.BlockSpec((1, th), lambda i, h: (0, h)),         # b_gate block
            pl.BlockSpec((1, th), lambda i, h: (0, h)),         # b_up   block
            pl.BlockSpec((th, e_pad), lambda i, h: (h, 0)),     # w_down block
            pl.BlockSpec((1, e_pad), lambda i, h: (0, 0)),      # b_down (constant)
        ]
        args = (x2, prep["w_gate"], prep["w_up"], prep["b_gate"], prep["b_up"],
                prep["w_down"], prep["b_down"])
        n_w1 = 2
    else:
        kernel = _ffn_gelu_kernel
        in_specs = [
            tok_spec,
            pl.BlockSpec((e_pad, th), lambda i, h: (0, h)),     # w_up   block
            pl.BlockSpec((1, th), lambda i, h: (0, h)),         # b_up   block
            pl.BlockSpec((th, e_pad), lambda i, h: (h, 0)),     # w_down block
            pl.BlockSpec((1, e_pad), lambda i, h: (0, 0)),      # b_down (constant)
        ]
        args = (x2, prep["w_up"], prep["b_up"], prep["w_down"], prep["b_down"])
        n_w1 = 1

    # Tight per-step VMEM estimate -> compiler limit, clamped to 85% of device VMEM.
    fp = _vmem_footprint(tm, th, e_pad, csize, osize, gated)
    vmem_limit = max(int(1.2 * fp) + (4 << 20), 32 << 20)
    vmem_limit = min(vmem_limit, prep["vmem_cap_bytes"] * 85 // 100)

    flops = 2 * N * e_pad * h_pad * n_w1 + 2 * N * h_pad * e_pad
    bytes_accessed = ((n_w1 + 1) * e_pad * h_pad * csize
                      + (n_w1 * h_pad + e_pad) * 4
                      + N * e_pad * (csize + osize))
    cost = pl.CostEstimate(flops=int(flops),
                           transcendentals=int(N * h_pad),
                           bytes_accessed=int(bytes_accessed))

    y2 = pl.pallas_call(
        kernel,
        out_shape=jax.ShapeDtypeStruct((N, e_pad), x.dtype),
        grid_spec=pltpu.PrefetchScalarGridSpec(
            num_scalar_prefetch=0,
            grid=grid,
            in_specs=in_specs,
            out_specs=tok_spec,
            scratch_shapes=[pltpu.VMEM((tm, e_pad), jnp.float32)],
        ),
        compiler_params=pltpu.CompilerParams(
            dimension_semantics=("parallel", "arbitrary"),
            vmem_limit_bytes=vmem_limit,
        ),
        cost_estimate=cost,
    )(*args)

    if e_pad != E:
        y2 = y2[:, :E]
    return y2.reshape(B, T, E)


# pure-JAX reference for correctness checks
def feed_forward_ref(x, params, *, use_gated_mlp=True):
    if use_gated_mlp:
        g = x @ params["w_gate"] + params["b_gate"][0]
        u = x @ params["w_up"] + params["b_up"][0]
        h = jax.nn.silu(g) * u
    else:
        u = x @ params["w_up"] + params["b_up"][0]
        h = jax.nn.gelu(u, approximate=True)
    return h @ params["w_down"] + params["b_down"][0]


# ------------------------------- main ----------------------------------------

if __name__ == "__main__":
    # config: embed_size=32, expansion_ratio=4, use_gated_mlp=True, use_bias=True,
    #         dropout=0.0 (inference), num_layers=2
    B, T, E = 2, 8, 32
    H = int(E * 4)

    key = jax.random.PRNGKey(0)
    kx, kg, kgb, ku, kub, kd, kdb = jax.random.split(key, 7)

    def linear_init(kw, kb, fan_in, fan_out):
        bound = 1.0 / math.sqrt(fan_in)
        w = jax.random.uniform(kw, (fan_in, fan_out), jnp.float32, -bound, bound)
        b = jax.random.uniform(kb, (1, fan_out), jnp.float32, -bound, bound)
        return w, b

    w_gate, b_gate = linear_init(kg, kgb, E, H)
    w_up, b_up = linear_init(ku, kub, E, H)
    w_down, b_down = linear_init(kd, kdb, H, E)
    params = dict(w_gate=w_gate, b_gate=b_gate,
                  w_up=w_up, b_up=b_up,
                  w_down=w_down, b_down=b_down)

    x = jax.random.normal(kx, (B, T, E), jnp.float32)

    y_ref_gated = feed_forward_ref(x, params, use_gated_mlp=True)
    y_ref_gelu = feed_forward_ref(x, params, use_gated_mlp=False)

    # f32 compute path: tight check vs reference
    prep_f32 = prepare_ffn_params(params, use_gated_mlp=True, compute_dtype=jnp.float32)
    y_f32 = feed_forward(x, prep_f32)
    jax.block_until_ready(y_f32)
    assert y_f32.shape == (B, T, E)
    assert jnp.allclose(y_f32, y_ref_gated, atol=1e-4, rtol=1e-4), "f32 gated mismatch"

    # bf16 MXU production path: looser tolerance due to bf16 operands
    prep_bf16 = prepare_ffn_params(params, use_gated_mlp=True)
    y_bf16 = feed_forward(x, prep_bf16)
    jax.block_until_ready(y_bf16)
    assert jnp.allclose(y_bf16.astype(jnp.float32), y_ref_gated, atol=2e-2, rtol=2e-2), \
        "bf16 gated mismatch"

    # non-gated (gelu-tanh) path, f32
    prep_gelu = prepare_ffn_params(params, use_gated_mlp=False, compute_dtype=jnp.float32)
    y_gelu = feed_forward(x, prep_gelu)
    jax.block_until_ready(y_gelu)
    assert jnp.allclose(y_gelu, y_ref_gelu, atol=1e-4, rtol=1e-4), "gelu path mismatch"

    print("KERNEL_OK")
</pallas_src>

<mosaic_0001>
module attributes {stable_mosaic.version = 11 : i64} {
  func.func @_ffn_gated_kernel(%arg0: i32, %arg1: i32, %arg2: memref<8x128xf32, #tpu.memory_space<vmem>>, %arg3: memref<128x128xf32, #tpu.memory_space<vmem>>, %arg4: memref<128x128xf32, #tpu.memory_space<vmem>>, %arg5: memref<1x128xf32, #tpu.memory_space<vmem>>, %arg6: memref<1x128xf32, #tpu.memory_space<vmem>>, %arg7: memref<128x128xf32, #tpu.memory_space<vmem>>, %arg8: memref<1x128xf32, #tpu.memory_space<vmem>>, %arg9: memref<8x128xf32, #tpu.memory_space<vmem>>, %arg10: memref<8x128xf32, #tpu.memory_space<vmem>>) attributes {dimension_semantics = [#tpu.dimension_semantics<parallel>, #tpu.dimension_semantics<arbitrary>], iteration_bounds = array<i64: 2, 1>, scalar_prefetch = 0 : i64, scratch_operands = 1 : i64, tpu.core_type = #tpu.core_type<tc>, window_params = [{transform_indices = @transform_0, window_bounds = array<i64: 8, 128>}, {transform_indices = @transform_1, window_bounds = array<i64: 128, 128>}, {transform_indices = @transform_2, window_bounds = array<i64: 128, 128>}, {transform_indices = @transform_3, window_bounds = array<i64: 1, 128>}, {transform_indices = @transform_4, window_bounds = array<i64: 1, 128>}, {transform_indices = @transform_5, window_bounds = array<i64: 128, 128>}, {pipeline_mode = #tpu.pipeline_mode<synchronous>, transform_indices = @transform_6, window_bounds = array<i64: 1, 128>}, {transform_indices = @transform_7, window_bounds = array<i64: 8, 128>}]} {
    %c0_i32 = arith.constant 0 : i32
    %0 = arith.cmpi eq, %arg1, %c0_i32 : i32
    %1 = arith.extui %0 : i1 to i32
    %c0_i32_0 = arith.constant 0 : i32
    %2 = arith.cmpi ne, %1, %c0_i32_0 : i32
    scf.if %2 {
      %cst_21 = arith.constant 0.000000e+00 : f32
      %29 = vector.broadcast %cst_21 : f32 to vector<8x128xf32>
      %c0_22 = arith.constant 0 : index
      %c0_23 = arith.constant 0 : index
      %30 = vector.load %arg10[%c0_22, %c0_23] : memref<8x128xf32, #tpu.memory_space<vmem>>, vector<8x128xf32>
      tpu.vector_store %arg10[%c0_22, %c0_23], %29 {strides = array<i32>} : memref<8x128xf32, #tpu.memory_space<vmem>>, vector<8x128xf32>,
    } else {
    }
    %c0 = arith.constant 0 : index
    %c0_1 = arith.constant 0 : index
    %3 = vector.load %arg2[%c0, %c0_1] : memref<8x128xf32, #tpu.memory_space<vmem>>, vector<8x128xf32>
    %c0_2 = arith.constant 0 : index
    %c0_3 = arith.constant 0 : index
    %4 = vector.load %arg3[%c0_2, %c0_3] : memref<128x128xf32, #tpu.memory_space<vmem>>, vector<128x128xf32>
    %cst = arith.constant dense<0.000000e+00> : vector<8x128xf32>
    %5 = tpu.matmul %3, %4, %cst {dimension_numbers = #tpu.dot_dimension_numbers<[1], [0], [0], [1], [0, 0, 1, 1], [], []>} : vector<8x128xf32>, vector<128x128xf32>, vector<8x128xf32> -> vector<8x128xf32>
    %c0_4 = arith.constant 0 : index
    %c0_5 = arith.constant 0 : index
    %6 = vector.load %arg5[%c0_4, %c0_5] : memref<1x128xf32, #tpu.memory_space<vmem>>, vector<1x128xf32>
    %7 = vector.broadcast %6 : vector<1x128xf32> to vector<8x128xf32>
    %8 = arith.addf %5, %7 : vector<8x128xf32>
    %c0_6 = arith.constant 0 : index
    %c0_7 = arith.constant 0 : index
    %9 = vector.load %arg4[%c0_6, %c0_7] : memref<128x128xf32, #tpu.memory_space<vmem>>, vector<128x128xf32>
    %cst_8 = arith.constant dense<0.000000e+00> : vector<8x128xf32>
    %10 = tpu.matmul %3, %9, %cst_8 {dimension_numbers = #tpu.dot_dimension_numbers<[1], [0], [0], [1], [0, 0, 1, 1], [], []>} : vector<8x128xf32>, vector<128x128xf32>, vector<8x128xf32> -> vector<8x128xf32>
    %c0_9 = arith.constant 0 : index
    %c0_10 = arith.constant 0 : index
    %11 = vector.load %arg6[%c0_9, %c0_10] : memref<1x128xf32, #tpu.memory_space<vmem>>, vector<1x128xf32>
    %12 = vector.broadcast %11 : vector<1x128xf32> to vector<8x128xf32>
    %13 = arith.addf %10, %12 : vector<8x128xf32>
    %14 = arith.negf %8 : vector<8x128xf32>
    %15 = math.exp %14 : vector<8x128xf32>
    %cst_11 = arith.constant 1.000000e+00 : f32
    %16 = vector.broadcast %cst_11 : f32 to vector<8x128xf32>
    %17 = arith.addf %16, %15 : vector<8x128xf32>
    %18 = arith.divf %16, %17 : vector<8x128xf32>
    %19 = arith.mulf %8, %18 : vector<8x128xf32>
    %20 = arith.mulf %19, %13 : vector<8x128xf32>
    %c0_12 = arith.constant 0 : index
    %c0_13 = arith.constant 0 : index
    %21 = vector.load %arg10[%c0_12, %c0_13] : memref<8x128xf32, #tpu.memory_space<vmem>>, vector<8x128xf32>
    %c0_14 = arith.constant 0 : index
    %c0_15 = arith.constant 0 : index
    %22 = vector.load %arg7[%c0_14, %c0_15] : memref<128x128xf32, #tpu.memory_space<vmem>>, vector<128x128xf32>
    %cst_16 = arith.constant dense<0.000000e+00> : vector<8x128xf32>
    %23 = tpu.matmul %20, %22, %cst_16 {dimension_numbers = #tpu.dot_dimension_numbers<[1], [0], [0], [1], [0, 0, 1, 1], [], []>} : vector<8x128xf32>, vector<128x128xf32>, vector<8x128xf32> -> vector<8x128xf32>
    %24 = arith.addf %21, %23 : vector<8x128xf32>
    %c0_17 = arith.constant 0 : index
    %c0_18 = arith.constant 0 : index
    %25 = vector.load %arg10[%c0_17, %c0_18] : memref<8x128xf32, #tpu.memory_space<vmem>>, vector<8x128xf32>
    tpu.vector_store %arg10[%c0_17, %c0_18], %24 {strides = array<i32>} : memref<8x128xf32, #tpu.memory_space<vmem>>, vector<8x128xf32>,
    %c0_i32_19 = arith.constant 0 : i32
    %26 = arith.cmpi eq, %arg1, %c0_i32_19 : i32
    %27 = arith.extui %26 : i1 to i32
    %c0_i32_20 = arith.constant 0 : i32
    %28 = arith.cmpi ne, %27, %c0_i32_20 : i32
    scf.if %28 {
      %c0_21 = arith.constant 0 : index
      %c0_22 = arith.constant 0 : index
      %29 = vector.load %arg10[%c0_21, %c0_22] : memref<8x128xf32, #tpu.memory_space<vmem>>, vector<8x128xf32>
      %c0_23 = arith.constant 0 : index
      %c0_24 = arith.constant 0 : index
      %30 = vector.load %arg8[%c0_23, %c0_24] : memref<1x128xf32, #tpu.memory_space<vmem>>, vector<1x128xf32>
      %31 = vector.broadcast %30 : vector<1x128xf32> to vector<8x128xf32>
      %32 = arith.addf %29, %31 : vector<8x128xf32>
      %c0_25 = arith.constant 0 : index
      %c0_26 = arith.constant 0 : index
      %33 = vector.load %arg9[%c0_25, %c0_26] : memref<8x128xf32, #tpu.memory_space<vmem>>, vector<8x128xf32>
      tpu.vector_store %arg9[%c0_25, %c0_26], %32 {strides = array<i32>} : memref<8x128xf32, #tpu.memory_space<vmem>>, vector<8x128xf32>,
    } else {
    }
    return
  }
  func.func @transform_0(%arg0: i32, %arg1: i32) -> (i32, i32) {
    %c0_i32 = arith.constant 0 : i32
    %c0_i32_0 = arith.constant 0 : i32
    return %arg0, %c0_i32 : i32, i32
  }
  func.func @transform_1(%arg0: i32, %arg1: i32) -> (i32, i32) {
    %c0_i32 = arith.constant 0 : i32
    %c0_i32_0 = arith.constant 0 : i32
    return %c0_i32, %arg1 : i32, i32
  }
  func.func @transform_2(%arg0: i32, %arg1: i32) -> (i32, i32) {
    %c0_i32 = arith.constant 0 : i32
    %c0_i32_0 = arith.constant 0 : i32
    return %c0_i32, %arg1 : i32, i32
  }
  func.func @transform_3(%arg0: i32, %arg1: i32) -> (i32, i32) {
    %c0_i32 = arith.constant 0 : i32
    %c0_i32_0 = arith.constant 0 : i32
    return %c0_i32, %arg1 : i32, i32
  }
  func.func @transform_4(%arg0: i32, %arg1: i32) -> (i32, i32) {
    %c0_i32 = arith.constant 0 : i32
    %c0_i32_0 = arith.constant 0 : i32
    return %c0_i32, %arg1 : i32, i32
  }
  func.func @transform_5(%arg0: i32, %arg1: i32) -> (i32, i32) {
    %c0_i32 = arith.constant 0 : i32
    %c0_i32_0 = arith.constant 0 : i32
    return %arg1, %c0_i32 : i32, i32
  }
  func.func @transform_6(%arg0: i32, %arg1: i32) -> (i32, i32) {
    %c0_i32 = arith.constant 0 : i32
    %c0_i32_0 = arith.constant 0 : i32
    %c0_i32_1 = arith.constant 0 : i32
    return %c0_i32, %c0_i32_0 : i32, i32
  }
  func.func @transform_7(%arg0: i32, %arg1: i32) -> (i32, i32) {
    %c0_i32 = arith.constant 0 : i32
    %c0_i32_0 = arith.constant 0 : i32
    return %arg0, %c0_i32 : i32, i32
  }
}

</mosaic_0001>

<llo_original>
// kernel: tpu_custom_call.1
$region0: #{tpu_custom_call.1}
  #allocation0 [shape = 'u32[]', space=smem, size = 0x4, offset = 0x4, fixed_abs, tag = 'smem constant byte address 0x4 - core index']
  #allocation1 [shape = 'u32[144,128]{1,0:T(1,128)}', space=vmem, size = 0x12000, scoped, tag = 'internal scratch']
  #allocation2 [shape = 'f32[8,128]{1,0:T(8,128)}', space=vmem, size = 0x1000, scoped, tag = 'scratch operand']
  %s0 = inlined_call_operand.hbm [shape: f32[16,128], index: 0, kind: input, shape index: {}]
  %s1 = inlined_call_operand.hbm [shape: f32[128,128], index: 1, kind: input, shape index: {}]
  %s2 = inlined_call_operand.hbm [shape: f32[128,128], index: 2, kind: input, shape index: {}]
  %s3 = inlined_call_operand.vmem [shape: f32[1,128], index: 3, kind: input, shape index: {}]
  %s4 = inlined_call_operand.vmem [shape: f32[1,128], index: 4, kind: input, shape index: {}]
  %s5 = inlined_call_operand.hbm [shape: f32[128,128], index: 5, kind: input, shape index: {}]
  %s6 = inlined_call_operand.vmem [shape: f32[1,128], index: 6, kind: input, shape index: {}]
  %s7 = inlined_call_operand.hbm [shape: f32[16,128], index: 7, kind: output, shape index: {}]
  %s8 = sld [smem:[#allocation0]]
  $region85: #{tpu_custom_call.1} parent=0
    _
  %s10 = ssub.s32 1, %s8
  %s11 = scalar_select 0, %s10, %s8
  $region1: #{tpu_custom_call.1} parent=0
    #allocation3 [shape = 'u8[8192]{0}', space=vmem, size = 0x2000, scoped, tag = 'input window, operand 0']
    #allocation4 [shape = 's32[2]{0}', space=sflag, size = 0x8, scoped, tag = 'scoped memory for tpu_custom_call.1']
    #allocation5 [shape = 's32[2]{0}', space=sflag, size = 0x8, scoped, tag = 'scoped memory for tpu_custom_call.1']
    #allocation6 [shape = 'u8[65536]{0}', space=vmem, size = 0x10000, scoped, tag = 'input window, operand 1, single buffered']
    #allocation7 [shape = 's32[1]{0}', space=sflag, size = 0x4, scoped, tag = 'scoped memory for tpu_custom_call.1']
    #allocation8 [shape = 'u8[65536]{0}', space=vmem, size = 0x10000, scoped, tag = 'input window, operand 2, single buffered']
    #allocation9 [shape = 'u8[65536]{0}', space=vmem, size = 0x10000, scoped, tag = 'input window, operand 5, single buffered']
    #allocation10 [shape = 's32[1]{0}', space=sflag, size = 0x4, scoped, tag = 'scoped memory for tpu_custom_call.1']
    #allocation11 [shape = 'u8[8192]{0}', space=vmem, size = 0x2000, scoped, tag = 'output window, operand 0']
    %12 = vsyncpa [#allocation4], 0
    %s13 = scalar_lea.sflag [#allocation4], 1
    %14 = vsyncpa %s13, 0
    %15 = vsyncpa [#allocation7], 0
    %16 = vsyncpa [#allocation10], 0
    %17 = vsyncpa [#allocation5], 0
    %s18 = scalar_lea.sflag [#allocation5], 1
    %19 = vsyncpa %s18, 0
    loop: start=0, step=1, limit=4
    $region2: #{tpu_custom_call.1} parent=1 // loop_pre_header
      _
    $region3: #{tpu_custom_call.1} parent=1 // loop_header
      %s21 = sphi 0, %s25
      %p22 = scmp.ge.s32.totalorder %s21, 4
      %s28 = sphi 0, %s40
      %s29 = sphi 0, %s36
      %s30 = sphi 0, %s28
      %s31 = sphi 0, %s29
      %s32 = sphi 0, %s30
      %s33 = sphi 0, %s31
      %s43 = sphi 0, %s45
      %s46 = sphi 0, %s43
      %s47 = sphi 0, %s46
      %s63 = sphi 0, %s47
      %s69 = sphi 0, %s71
      %s72 = sphi 0, %s69
      %s73 = sphi 0, %s72
      %s89 = sphi 0, %s73
      %s95 = sphi 0, %s97
      %s98 = sphi 0, %s95
      %s99 = sphi 0, %s98
      %s115 = sphi 0, %s99
      %s121 = sphi 0, %s123
      %s124 = sphi 0, %s121
      %s125 = sphi 0, %s124
      %s141 = sphi 0, %s125
      %s147 = sphi 0, %s149
      %s150 = sphi 0, %s147
      %s151 = sphi 0, %s150
      %s167 = sphi 0, %s151
      %s173 = sphi 0, %s175
      %s176 = sphi 0, %s173
      %s177 = sphi 0, %s176
      %s193 = sphi 0, %s177
      %s197 = sphi 0, %s197
      %s199 = sphi 0, %s197
      %s200 = sphi 0, %s199
      %s214 = sphi 0, %s200
      %s220 = sphi 0, %s222
      %s223 = sphi 0, %s220
      %s224 = sphi 0, %s223
      %s240 = sphi 0, %s224
    $region4: #{tpu_custom_call.1} parent=1 // loop_header_branch
      %24 = sbr.rel (%p22) target = $region8
    $region5: #{tpu_custom_call.1} parent=1 // loop_body
      %s26 = ssub.s32 %s21, 1
      %s27 = ssub.s32 %s21, 2
      %s34 = sadd.s32 1, %s29
      %p35 = scmp.ge.s32.totalorder %s34, 1
      %s36 = scalar_select %p35, 0, %s34
      %s37 = sadd.s32 1, %s28
      %s38 = scalar_select %p35, %s37, %s28
      %p39 = scmp.ge.s32.totalorder %s38, 2
      %s40 = scalar_select %p39, 0, %s38
      %s41 = ssub.s32 %s28, %s40
      %p42 = scmp.eq.s32.totalorder %s41, 0
      %s44 = sadd.s32 %s43, 1
      %s45 = scalar_select %p42, %s43, %s44
      %p48 = pneg %p42
      %p49 = scmp.eq.s32.totalorder %s21, 1
      %p50 = por %p48, %p49
      %p51 = scmp.ne.s32.totalorder %s43, %s46
      %p52 = scmp.eq.s32.totalorder %s21, 0
      %p53 = por %p51, %p52
      %p54 = scmp.ne.s32.totalorder %s43, %s46
      %p55 = scmp.eq.s32.totalorder %s26, 1
      %p56 = por %p54, %p55
      %p57 = scmp.ne.s32.totalorder %s46, %s47
      %p58 = scmp.eq.s32.totalorder %s26, 0
      %p59 = por %p57, %p58
      %p60 = scmp.ne.s32.totalorder %s46, %s47
      %p61 = scmp.eq.s32.totalorder %s27, 1
      %p62 = por %p60, %p61
      %p64 = scmp.ne.s32.totalorder %s47, %s63
      %p65 = scmp.eq.s32.totalorder %s27, 0
      %p66 = por %p64, %p65
      %s67 = ssub.s32 %s29, %s36
      %p68 = scmp.eq.s32.totalorder %s67, 0
      %s70 = sadd.s32 %s69, 1
      %s71 = scalar_select %p68, %s69, %s70
      %p74 = pneg %p68
      %p75 = scmp.eq.s32.totalorder %s21, 1
      %p76 = por %p74, %p75
      %p77 = scmp.ne.s32.totalorder %s69, %s72
      %p78 = scmp.eq.s32.totalorder %s21, 0
      %p79 = por %p77, %p78
      %p80 = scmp.ne.s32.totalorder %s69, %s72
      %p81 = scmp.eq.s32.totalorder %s26, 1
      %p82 = por %p80, %p81
      %p83 = scmp.ne.s32.totalorder %s72, %s73
      %p84 = scmp.eq.s32.totalorder %s26, 0
      %p85 = por %p83, %p84
      %p86 = scmp.ne.s32.totalorder %s72, %s73
      %p87 = scmp.eq.s32.totalorder %s27, 1
      %p88 = por %p86, %p87
      %p90 = scmp.ne.s32.totalorder %s73, %s89
      %p91 = scmp.eq.s32.totalorder %s27, 0
      %p92 = por %p90, %p91
      %s93 = ssub.s32 %s29, %s36
      %p94 = scmp.eq.s32.totalorder %s93, 0
      %s96 = sadd.s32 %s95, 1
      %s97 = scalar_select %p94, %s95, %s96
      %p100 = pneg %p94
      %p101 = scmp.eq.s32.totalorder %s21, 1
      %p102 = por %p100, %p101
      %p103 = scmp.ne.s32.totalorder %s95, %s98
      %p104 = scmp.eq.s32.totalorder %s21, 0
      %p105 = por %p103, %p104
      %p106 = scmp.ne.s32.totalorder %s95, %s98
      %p107 = scmp.eq.s32.totalorder %s26, 1
      %p108 = por %p106, %p107
      %p109 = scmp.ne.s32.totalorder %s98, %s99
      %p110 = scmp.eq.s32.totalorder %s26, 0
      %p111 = por %p109, %p110
      %p112 = scmp.ne.s32.totalorder %s98, %s99
      %p113 = scmp.eq.s32.totalorder %s27, 1
      %p114 = por %p112, %p113
      %p116 = scmp.ne.s32.totalorder %s99, %s115
      %p117 = scmp.eq.s32.totalorder %s27, 0
      %p118 = por %p116, %p117
      %s119 = ssub.s32 %s29, %s36
      %p120 = scmp.eq.s32.totalorder %s119, 0
      %s122 = sadd.s32 %s121, 1
      %s123 = scalar_select %p120, %s121, %s122
      %p126 = pneg %p120
      %p127 = scmp.eq.s32.totalorder %s21, 1
      %p128 = por %p126, %p127
      %p129 = scmp.ne.s32.totalorder %s121, %s124
      %p130 = scmp.eq.s32.totalorder %s21, 0
      %p131 = por %p129, %p130
      %p132 = scmp.ne.s32.totalorder %s121, %s124
      %p133 = scmp.eq.s32.totalorder %s26, 1
      %p134 = por %p132, %p133
      %p135 = scmp.ne.s32.totalorder %s124, %s125
      %p136 = scmp.eq.s32.totalorder %s26, 0
      %p137 = por %p135, %p136
      %p138 = scmp.ne.s32.totalorder %s124, %s125
      %p139 = scmp.eq.s32.totalorder %s27, 1
      %p140 = por %p138, %p139
      %p142 = scmp.ne.s32.totalorder %s125, %s141
      %p143 = scmp.eq.s32.totalorder %s27, 0
      %p144 = por %p142, %p143
      %s145 = ssub.s32 %s29, %s36
      %p146 = scmp.eq.s32.totalorder %s145, 0
      %s148 = sadd.s32 %s147, 1
      %s149 = scalar_select %p146, %s147, %s148
      %p152 = pneg %p146
      %p153 = scmp.eq.s32.totalorder %s21, 1
      %p154 = por %p152, %p153
      %p155 = scmp.ne.s32.totalorder %s147, %s150
      %p156 = scmp.eq.s32.totalorder %s21, 0
      %p157 = por %p155, %p156
      %p158 = scmp.ne.s32.totalorder %s147, %s150
      %p159 = scmp.eq.s32.totalorder %s26, 1
      %p160 = por %p158, %p159
      %p161 = scmp.ne.s32.totalorder %s150, %s151
      %p162 = scmp.eq.s32.totalorder %s26, 0
      %p163 = por %p161, %p162
      %p164 = scmp.ne.s32.totalorder %s150, %s151
      %p165 = scmp.eq.s32.totalorder %s27, 1
      %p166 = por %p164, %p165
      %p168 = scmp.ne.s32.totalorder %s151, %s167
      %p169 = scmp.eq.s32.totalorder %s27, 0
      %p170 = por %p168, %p169
      %s171 = ssub.s32 %s29, %s36
      %p172 = scmp.eq.s32.totalorder %s171, 0
      %s174 = sadd.s32 %s173, 1
      %s175 = scalar_select %p172, %s173, %s174
      %p178 = pneg %p172
      %p179 = scmp.eq.s32.totalorder %s21, 1
      %p180 = por %p178, %p179
      %p181 = scmp.ne.s32.totalorder %s173, %s176
      %p182 = scmp.eq.s32.totalorder %s21, 0
      %p183 = por %p181, %p182
      %p184 = scmp.ne.s32.totalorder %s173, %s176
      %p185 = scmp.eq.s32.totalorder %s26, 1
      %p186 = por %p184, %p185
      %p187 = scmp.ne.s32.totalorder %s176, %s177
      %p188 = scmp.eq.s32.totalorder %s26, 0
      %p189 = por %p187, %p188
      %p190 = scmp.ne.s32.totalorder %s176, %s177
      %p191 = scmp.eq.s32.totalorder %s27, 1
      %p192 = por %p190, %p191
      %p194 = scmp.ne.s32.totalorder %s177, %s193
      %p195 = scmp.eq.s32.totalorder %s27, 0
      %p196 = por %p194, %p195
      %s198 = sadd.s32 %s197, 1
      %p201 = scmp.eq.s32.totalorder %s21, 1
      %p202 = scmp.ne.s32.totalorder %s197, %s199
      %p203 = scmp.eq.s32.totalorder %s21, 0
      %p204 = por %p202, %p203
      %p205 = scmp.ne.s32.totalorder %s197, %s199
      %p206 = scmp.eq.s32.totalorder %s26, 1
      %p207 = por %p205, %p206
      %p208 = scmp.ne.s32.totalorder %s199, %s200
      %p209 = scmp.eq.s32.totalorder %s26, 0
      %p210 = por %p208, %p209
      %p211 = scmp.ne.s32.totalorder %s199, %s200
      %p212 = scmp.eq.s32.totalorder %s27, 1
      %p213 = por %p211, %p212
      %p215 = scmp.ne.s32.totalorder %s200, %s214
      %p216 = scmp.eq.s32.totalorder %s27, 0
      %p217 = por %p215, %p216
      %s218 = ssub.s32 %s28, %s40
      %p219 = scmp.eq.s32.totalorder %s218, 0
      %s221 = sadd.s32 %s220, 1
      %s222 = scalar_select %p219, %s220, %s221
      %p225 = pneg %p219
      %p226 = scmp.eq.s32.totalorder %s21, 1
      %p227 = por %p225, %p226
      %p228 = scmp.ne.s32.totalorder %s220, %s223
      %p229 = scmp.eq.s32.totalorder %s21, 0
      %p230 = por %p228, %p229
      %p231 = scmp.ne.s32.totalorder %s220, %s223
      %p232 = scmp.eq.s32.totalorder %s26, 1
      %p233 = por %p231, %p232
      %p234 = scmp.ne.s32.totalorder %s223, %s224
      %p235 = scmp.eq.s32.totalorder %s26, 0
      %p236 = por %p234, %p235
      %p237 = scmp.ne.s32.totalorder %s223, %s224
      %p238 = scmp.eq.s32.totalorder %s27, 1
      %p239 = por %p237, %p238
      %p241 = scmp.ne.s32.totalorder %s224, %s240
      %p242 = scmp.eq.s32.totalorder %s27, 0
      %p243 = por %p241, %p242
      %p244 = scmp.le.s32.totalorder 1, %s21
      %p245 = scmp.lt.s32.totalorder %s21, 3
      %p246 = pnand %p244, %p245
      %p247 = pneg %p246
      // Predicated region
      $region9: #{tpu_custom_call.1} parent=5 // pred_check
        _
      $region10: #{tpu_custom_call.1} parent=5 // pred_check_branch
        %249 = sbr.rel (%p246) target = $region12
      $region11: #{tpu_custom_call.1} parent=5 // pred_region
        %s250 = ssub.s32 %s21, 1
        // Predicated region
        $region13: #{tpu_custom_call.1} parent=11 // pred_check
          %p251 = pneg %p85
        $region14: #{tpu_custom_call.1} parent=11 // pred_check_branch
          %253 = sbr.rel (%p251) target = $region16
        $region15: #{tpu_custom_call.1} parent=11 // pred_region
          %s255 = ssub.s32 2048, 2048
          %256 = vsyncadd [#allocation7], %s255
          %s257 = smul.addr %s31, 128
          %s258 = scalar_lea.hbm %s1, %s257
          %s259 = sshll.u32 [#allocation6], 4
          %s260 = int_to_ptr.vmem [resolvable:$true] %s259
          %265 = dma.hbm_to_vmem [thread:$0]  %s258, 2048, %s260, [#allocation7], 128, 128, 8
        $region16: #{tpu_custom_call.1} parent=11 // pred_fallthru
          _
        // Predicated region
        $region17: #{tpu_custom_call.1} parent=11 // pred_check
          %p266 = pneg %p111
        $region18: #{tpu_custom_call.1} parent=11 // pred_check_branch
          %268 = sbr.rel (%p266) target = $region20
        $region19: #{tpu_custom_call.1} parent=11 // pred_region
          %s270 = ssub.s32 2048, 2048
          %271 = vsyncadd [#allocation7], %s270
          %s272 = smul.addr %s31, 128
          %s273 = scalar_lea.hbm %s2, %s272
          %s274 = sshll.u32 [#allocation8], 4
          %s275 = int_to_ptr.vmem [resolvable:$true] %s274
          %280 = dma.hbm_to_vmem [thread:$0]  %s273, 2048, %s275, [#allocation7], 128, 128, 8
        $region20: #{tpu_custom_call.1} parent=11 // pred_fallthru
          _
        // Predicated region
        $region21: #{tpu_custom_call.1} parent=11 // pred_check
          %p281 = pneg %p137
        $region22: #{tpu_custom_call.1} parent=11 // pred_check_branch
          %283 = sbr.rel (%p281) target = $region24
        $region23: #{tpu_custom_call.1} parent=11 // pred_region
          %p284 = scmp.lt.s32.totalorder %s31, 0
          %s285 = scalar_select %p284, %s31, 0
          %s286 = scalar_lea.vmem %s3, %s285
        $region24: #{tpu_custom_call.1} parent=11 // pred_fallthru
          _
        // Predicated region
        $region25: #{tpu_custom_call.1} parent=11 // pred_check
          %p287 = pneg %p163
        $region26: #{tpu_custom_call.1} parent=11 // pred_check_branch
          %289 = sbr.rel (%p287) target = $region28
        $region27: #{tpu_custom_call.1} parent=11 // pred_region
          %p290 = scmp.lt.s32.totalorder %s31, 0
          %s291 = scalar_select %p290, %s31, 0
          %s292 = scalar_lea.vmem %s4, %s291
        $region28: #{tpu_custom_call.1} parent=11 // pred_fallthru
          _
        // Predicated region
        $region29: #{tpu_custom_call.1} parent=11 // pred_check
          %p293 = pneg %p189
        $region30: #{tpu_custom_call.1} parent=11 // pred_check_branch
          %295 = sbr.rel (%p293) target = $region32
        $region31: #{tpu_custom_call.1} parent=11 // pred_region
          %s296 = smul.u32 16, %s31
          %s298 = ssub.s32 2048, 2048
          %299 = vsyncadd [#allocation10], %s298
          %s300 = smul.addr %s296, 128
          %s301 = scalar_lea.hbm %s5, %s300
          %s302 = sshll.u32 [#allocation9], 4
          %s303 = int_to_ptr.vmem [resolvable:$true] %s302
          %308 = dma.hbm_to_vmem [thread:$0]  %s301, 2048, %s303, [#allocation10], 128, 128, 8
        $region32: #{tpu_custom_call.1} parent=11 // pred_fallthru
          _
        // Predicated region
        $region33: #{tpu_custom_call.1} parent=11 // pred_check
          %p309 = pneg %p210
        $region34: #{tpu_custom_call.1} parent=11 // pred_check_branch
          %311 = sbr.rel (%p309) target = $region36
        $region35: #{tpu_custom_call.1} parent=11 // pred_region
          _
        $region36: #{tpu_custom_call.1} parent=11 // pred_fallthru
          _
      $region12: #{tpu_custom_call.1} parent=5 // pred_fallthru
        _
      %p312 = scmp.lt.s32.totalorder %s21, 2
      // Predicated region
      $region37: #{tpu_custom_call.1} parent=5 // pred_check
        %p313 = pneg %p312
      $region38: #{tpu_custom_call.1} parent=5 // pred_check_branch
        %315 = sbr.rel (%p313) target = $region40
      $region39: #{tpu_custom_call.1} parent=5 // pred_region
        // Predicated region
        $region41: #{tpu_custom_call.1} parent=39 // pred_check
          %p316 = pneg %p53
        $region42: #{tpu_custom_call.1} parent=39 // pred_check_branch
          %318 = sbr.rel (%p316) target = $region44
        $region43: #{tpu_custom_call.1} parent=39 // pred_region
          %s319 = sand.u32 %s43, 1
          %s320 = scalar_lea.sflag [#allocation4], %s319
          %s321 = sand.u32 %s43, 1
          %s322 = smul.addr %s321, 8
          %s323 = scalar_lea.vmem [#allocation3], %s322
          %s325 = ssub.s32 128, 128
          %326 = vsyncadd %s320, %s325
          %s327 = smul.addr %s28, 128
          %s328 = scalar_lea.hbm %s0, %s327
          %s330 = sshll.u32 %s323, 4
          %s331 = int_to_ptr.vmem [resolvable:$true] %s330
          %333 = dma.hbm_to_vmem [thread:$0]  %s328, 128, %s331, %s320
        $region44: #{tpu_custom_call.1} parent=39 // pred_fallthru
          _
      $region40: #{tpu_custom_call.1} parent=5 // pred_fallthru
        _
      %p334 = scmp.le.s32.totalorder 1, %s21
      %p335 = scmp.lt.s32.totalorder %s21, 3
      %p336 = pnand %p334, %p335
      %p337 = pneg %p336
      // Predicated region
      $region45: #{tpu_custom_call.1} parent=5 // pred_check
        _
      $region46: #{tpu_custom_call.1} parent=5 // pred_check_branch
        %339 = sbr.rel (%p336) target = $region48
      $region47: #{tpu_custom_call.1} parent=5 // pred_region
        %s340 = ssub.s32 %s21, 1
        %s341 = sand.u32 %s46, 1
        %s342 = scalar_lea.sflag [#allocation4], %s341
        %s343 = sand.u32 %s46, 1
        %s344 = smul.addr %s343, 8
        %s345 = scalar_lea.vmem [#allocation3], %s344
        // Predicated region
        $region49: #{tpu_custom_call.1} parent=47 // pred_check
          %p346 = pneg %p59
        $region50: #{tpu_custom_call.1} parent=47 // pred_check_branch
          %348 = sbr.rel (%p346) target = $region52
        $region51: #{tpu_custom_call.1} parent=47 // pred_region
          %349 = dma.done %s342, 128
        $region52: #{tpu_custom_call.1} parent=47 // pred_fallthru
          _
        // Predicated region
        $region53: #{tpu_custom_call.1} parent=47 // pred_check
          %p350 = pneg %p85
        $region54: #{tpu_custom_call.1} parent=47 // pred_check_branch
          %352 = sbr.rel (%p350) target = $region56
        $region55: #{tpu_custom_call.1} parent=47 // pred_region
          %353 = dma.done [#allocation7], 2048
        $region56: #{tpu_custom_call.1} parent=47 // pred_fallthru
          _
        // Predicated region
        $region57: #{tpu_custom_call.1} parent=47 // pred_check
          %p354 = pneg %p111
        $region58: #{tpu_custom_call.1} parent=47 // pred_check_branch
          %356 = sbr.rel (%p354) target = $region60
        $region59: #{tpu_custom_call.1} parent=47 // pred_region
          %357 = dma.done [#allocation7], 2048
        $region60: #{tpu_custom_call.1} parent=47 // pred_fallthru
          _
        // Predicated region
        $region61: #{tpu_custom_call.1} parent=47 // pred_check
          %p358 = pneg %p189
        $region62: #{tpu_custom_call.1} parent=47 // pred_check_branch
          %360 = sbr.rel (%p358) target = $region64
        $region63: #{tpu_custom_call.1} parent=47 // pred_region
          %361 = dma.done [#allocation10], 2048
        $region64: #{tpu_custom_call.1} parent=47 // pred_fallthru
          _
        %s362 = sand.u32 %s46, 1
        %s363 = scalar_lea.sflag [#allocation4], %s362
        %s364 = sand.u32 %s46, 1
        %s365 = smul.addr %s364, 8
        %s366 = scalar_lea.vmem [#allocation3], %s365
        %p367 = pneg %p59
        %p368 = pneg %p56
        %p369 = pneg %p85
        %p370 = pneg %p82
        %p371 = pneg %p111
        %p372 = pneg %p108
        %p373 = scmp.lt.s32.totalorder %s31, 0
        %s374 = scalar_select %p373, %s31, 0
        %s375 = scalar_lea.vmem %s3, %s374
        %p376 = pneg %p137
        %p377 = pneg %p134
        %p378 = scmp.lt.s32.totalorder %s31, 0
        %s379 = scalar_select %p378, %s31, 0
        %s380 = scalar_lea.vmem %s4, %s379
        %p381 = pneg %p163
        %p382 = pneg %p160
        %p383 = pneg %p189
        %p384 = pneg %p186
        %p385 = pneg %p210
        %p386 = pneg %p207
        %p387 = pneg %p236
        %p388 = pneg %p233
        %s389 = sand.u32 %s223, 1
        %s390 = scalar_lea.sflag [#allocation5], %s389
        %s391 = sand.u32 %s223, 1
        %s392 = smul.addr %s391, 8
        %s393 = scalar_lea.vmem [#allocation11], %s392
        %p394 = scmp.lt.s32.totalorder %s31, 0
        %s395 = scalar_select %p394, %s31, 0
        %s396 = scalar_lea.vmem %s3, %s395
        %p397 = scmp.lt.s32.totalorder %s31, 0
        %s398 = scalar_select %p397, %s31, 0
        %s399 = scalar_lea.vmem %s4, %s398
        %s400 = smul.u32 16, %s31
        %p401 = scmp.eq.s32.totalorder %s31, 0
        // Predicated region
        $region65: #{tpu_custom_call.1} parent=47 // pred_check
          %p402 = pneg %p401
        $region66: #{tpu_custom_call.1} parent=47 // pred_check_branch
          %404 = sbr.rel (%p402) target = $region68
        $region67: #{tpu_custom_call.1} parent=47 // pred_region
          %405 = vst [vmem:[#allocation2] sm:$0xff] 0.0
        $region68: #{tpu_custom_call.1} parent=47 // pred_fallthru
          _
        %v406 = vld [vmem:[%s345] sm:$0xff]
        %v407 = vld [vmem:[#allocation6] sm:$0xff]
        %v408 = vld [vmem:[#allocation6 + $0x8] sm:$0xff]
        %v409 = vld [vmem:[#allocation6 + $0x10] sm:$0xff]
        %v410 = vld [vmem:[#allocation6 + $0x18] sm:$0xff]
        %v411 = vld [vmem:[#allocation6 + $0x20] sm:$0xff]
        %v412 = vld [vmem:[#allocation6 + $0x28] sm:$0xff]
        %v413 = vld [vmem:[#allocation6 + $0x30] sm:$0xff]
        %v414 = vld [vmem:[#allocation6 + $0x38] sm:$0xff]
        %v415 = vld [vmem:[#allocation6 + $0x40] sm:$0xff]
        %v416 = vld [vmem:[#allocation6 + $0x48] sm:$0xff]
        %v417 = vld [vmem:[#allocation6 + $0x50] sm:$0xff]
        %v418 = vld [vmem:[#allocation6 + $0x58] sm:$0xff]
        %v419 = vld [vmem:[#allocation6 + $0x60] sm:$0xff]
        %v420 = vld [vmem:[#allocation6 + $0x68] sm:$0xff]
        %v421 = vld [vmem:[#allocation6 + $0x70] sm:$0xff]
        %v422 = vld [vmem:[#allocation6 + $0x78] sm:$0xff]
        %v423 = vld [vmem:[%s396] sm:$0x1]
        %v425 = vlaneseq
        %v426 = vshrl.u32 %v425, 7
        %v427 = vsub.s32 0, %v426
        %v428 = vrot.slane %v423, %v427
        %430 = vmatprep.subr.mxu0 0.0
        %431 = vmatpush1.msra.mxu0 %v422
        %432 = vmatprep.subr.mxu0 0.0
        %433 = vmatpush1.msra.mxu0 %v421
        %434 = vmatprep.subr.mxu0 0.0
        %435 = vmatpush1.msra.mxu0 %v420
        %436 = vmatprep.subr.mxu0 0.0
        %437 = vmatpush1.msra.mxu0 %v419
        %438 = vmatprep.subr.mxu0 0.0
        %439 = vmatpush1.msra.mxu0 %v418
        %440 = vmatprep.subr.mxu0 0.0
        %441 = vmatpush1.msra.mxu0 %v417
        %442 = vmatprep.subr.mxu0 0.0
        %443 = vmatpush1.msra.mxu0 %v416
        %444 = vmatprep.subr.mxu0 0.0
        %445 = vmatpush1.msra.mxu0 %v415
        %446 = vmatprep.subr.mxu0 0.0
        %447 = vmatpush1.msra.mxu0 %v414
        %448 = vmatprep.subr.mxu0 0.0
        %449 = vmatpush1.msra.mxu0 %v413
        %450 = vmatprep.subr.mxu0 0.0
        %451 = vmatpush1.msra.mxu0 %v412
        %452 = vmatprep.subr.mxu0 0.0
        %453 = vmatpush1.msra.mxu0 %v411
        %454 = vmatprep.subr.mxu0 0.0
        %455 = vmatpush1.msra.mxu0 %v410
        %456 = vmatprep.subr.mxu0 0.0
        %457 = vmatpush1.msra.mxu0 %v409
        %458 = vmatprep.subr.mxu0 0.0
        %459 = vmatpush1.msra.mxu0 %v408
        %460 = vmatprep.subr.mxu0 0.0
        %461 = vmatpush1.msra.mxu0 %v407
        %462 = vmatprep.subr.mxu0 0.0
        %463 = vmatpush2.msra.mxu0 0.0
        %464 = vmatprep.subr.mxu0 0.0
        %465 = vmatpush2.msra.mxu0 0.0
        %466 = vmatprep.subr.mxu0 0.0
        %467 = vmatpush2.msra.mxu0 0.0
        %468 = vmatprep.subr.mxu0 0.0
        %469 = vmatpush2.msra.mxu0 0.0
        %470 = vmatprep.subr.mxu0 0.0
        %471 = vmatpush2.msra.mxu0 0.0
        %472 = vmatprep.subr.mxu0 0.0
        %473 = vmatpush2.msra.mxu0 0.0
        %474 = vmatprep.subr.mxu0 0.0
        %475 = vmatpush2.msra.mxu0 0.0
        %476 = vmatprep.subr.mxu0 0.0
        %477 = vmatpush2.msra.mxu0 0.0
        %478 = vmatprep.subr.mxu0 0.0
        %479 = vmatpush2.msra.mxu0 0.0
        %480 = vmatprep.subr.mxu0 0.0
        %481 = vmatpush2.msra.mxu0 0.0
        %482 = vmatprep.subr.mxu0 0.0
        %483 = vmatpush2.msra.mxu0 0.0
        %484 = vmatprep.subr.mxu0 0.0
        %485 = vmatpush2.msra.mxu0 0.0
        %486 = vmatprep.subr.mxu0 0.0
        %487 = vmatpush2.msra.mxu0 0.0
        %488 = vmatprep.subr.mxu0 0.0
        %489 = vmatpush2.msra.mxu0 0.0
        %490 = vmatprep.subr.mxu0 0.0
        %491 = vmatpush2.msra.mxu0 0.0
        %492 = vmatprep.subr.mxu0 0.0
        %493 = vmatpush2.msra.mxu0 0.0
        %494 = vmatprep.mubr.f32.mxu0 0.0
        %495 = vmatmul.mubr.f32.gmra.mxu0 %v406
        %v496 = vpop.f32.mrf.mxu0
        %v497 = vadd.f32 %v428, %v496
        %v498 = vpop.f32.mrf.mxu0
        %499 = vdwg.mxu0
        %v500 = vld [vmem:[#allocation8] sm:$0xff]
        %v501 = vld [vmem:[#allocation8 + $0x8] sm:$0xff]
        %v502 = vld [vmem:[#allocation8 + $0x10] sm:$0xff]
        %v503 = vld [vmem:[#allocation8 + $0x18] sm:$0xff]
        %v504 = vld [vmem:[#allocation8 + $0x20] sm:$0xff]
        %v505 = vld [vmem:[#allocation8 + $0x28] sm:$0xff]
        %v506 = vld [vmem:[#allocation8 + $0x30] sm:$0xff]
        %v507 = vld [vmem:[#allocation8 + $0x38] sm:$0xff]
        %v508 = vld [vmem:[#allocation8 + $0x40] sm:$0xff]
        %v509 = vld [vmem:[#allocation8 + $0x48] sm:$0xff]
        %v510 = vld [vmem:[#allocation8 + $0x50] sm:$0xff]
        %v511 = vld [vmem:[#allocation8 + $0x58] sm:$0xff]
        %v512 = vld [vmem:[#allocation8 + $0x60] sm:$0xff]
        %v513 = vld [vmem:[#allocation8 + $0x68] sm:$0xff]
        %v514 = vld [vmem:[#allocation8 + $0x70] sm:$0xff]
        %v515 = vld [vmem:[#allocation8 + $0x78] sm:$0xff]
        %v516 = vld [vmem:[%s399] sm:$0x1]
        %v518 = vlaneseq
        %v519 = vshrl.u32 %v518, 7
        %v520 = vsub.s32 0, %v519
        %v521 = vrot.slane %v516, %v520
        %523 = vmatprep.subr.mxu0 0.0
        %524 = vmatpush1.msra.mxu0 %v515
        %525 = vmatprep.subr.mxu0 0.0
        %526 = vmatpush1.msra.mxu0 %v514
        %527 = vmatprep.subr.mxu0 0.0
        %528 = vmatpush1.msra.mxu0 %v513
        %529 = vmatprep.subr.mxu0 0.0
        %530 = vmatpush1.msra.mxu0 %v512
        %531 = vmatprep.subr.mxu0 0.0
        %532 = vmatpush1.msra.mxu0 %v511
        %533 = vmatprep.subr.mxu0 0.0
        %534 = vmatpush1.msra.mxu0 %v510
        %535 = vmatprep.subr.mxu0 0.0
        %536 = vmatpush1.msra.mxu0 %v509
        %537 = vmatprep.subr.mxu0 0.0
        %538 = vmatpush1.msra.mxu0 %v508
        %539 = vmatprep.subr.mxu0 0.0
        %540 = vmatpush1.msra.mxu0 %v507
        %541 = vmatprep.subr.mxu0 0.0
        %542 = vmatpush1.msra.mxu0 %v506
        %543 = vmatprep.subr.mxu0 0.0
        %544 = vmatpush1.msra.mxu0 %v505
        %545 = vmatprep.subr.mxu0 0.0
        %546 = vmatpush1.msra.mxu0 %v504
        %547 = vmatprep.subr.mxu0 0.0
        %548 = vmatpush1.msra.mxu0 %v503
        %549 = vmatprep.subr.mxu0 0.0
        %550 = vmatpush1.msra.mxu0 %v502
        %551 = vmatprep.subr.mxu0 0.0
        %552 = vmatpush1.msra.mxu0 %v501
        %553 = vmatprep.subr.mxu0 0.0
        %554 = vmatpush1.msra.mxu0 %v500
        %555 = vmatprep.subr.mxu0 0.0
        %556 = vmatpush2.msra.mxu0 0.0
        %557 = vmatprep.subr.mxu0 0.0
        %558 = vmatpush2.msra.mxu0 0.0
        %559 = vmatprep.subr.mxu0 0.0
        %560 = vmatpush2.msra.mxu0 0.0
        %561 = vmatprep.subr.mxu0 0.0
        %562 = vmatpush2.msra.mxu0 0.0
        %563 = vmatprep.subr.mxu0 0.0
        %564 = vmatpush2.msra.mxu0 0.0
        %565 = vmatprep.subr.mxu0 0.0
        %566 = vmatpush2.msra.mxu0 0.0
        %567 = vmatprep.subr.mxu0 0.0
        %568 = vmatpush2.msra.mxu0 0.0
        %569 = vmatprep.subr.mxu0 0.0
        %570 = vmatpush2.msra.mxu0 0.0
        %571 = vmatprep.subr.mxu0 0.0
        %572 = vmatpush2.msra.mxu0 0.0
        %573 = vmatprep.subr.mxu0 0.0
        %574 = vmatpush2.msra.mxu0 0.0
        %575 = vmatprep.subr.mxu0 0.0
        %576 = vmatpush2.msra.mxu0 0.0
        %577 = vmatprep.subr.mxu0 0.0
        %578 = vmatpush2.msra.mxu0 0.0
        %579 = vmatprep.subr.mxu0 0.0
        %580 = vmatpush2.msra.mxu0 0.0
        %581 = vmatprep.subr.mxu0 0.0
        %582 = vmatpush2.msra.mxu0 0.0
        %583 = vmatprep.subr.mxu0 0.0
        %584 = vmatpush2.msra.mxu0 0.0
        %585 = vmatprep.subr.mxu0 0.0
        %586 = vmatpush2.msra.mxu0 0.0
        %587 = vmatprep.mubr.f32.mxu0 0.0
        %588 = vmatmul.mubr.f32.gmra.mxu0 %v406
        %v589 = vpop.f32.mrf.mxu0
        %v590 = vadd.f32 %v521, %v589
        %v591 = vpop.f32.mrf.mxu0
        %592 = vdwg.mxu0
        %v593 = vxor.u32 %v497, 2147483648
        %v594 = vmul.f32 %v593, 1.442695
        %v595 = vpow.pop %v594
        %v596 = vadd.f32 %v595, 1.0
        %v597 = vrcp.pop %v596
        %v598 = vmul.f32 1.0, %v597
        %v599 = vmul.f32 %v497, %v598
        %v600 = vmul.f32 %v599, %v590
        %v601 = vld [vmem:[#allocation2] sm:$0xff]
        %v602 = vld [vmem:[#allocation9] sm:$0xff]
        %v603 = vld [vmem:[#allocation9 + $0x8] sm:$0xff]
        %v604 = vld [vmem:[#allocation9 + $0x10] sm:$0xff]
        %v605 = vld [vmem:[#allocation9 + $0x18] sm:$0xff]
        %v606 = vld [vmem:[#allocation9 + $0x20] sm:$0xff]
        %v607 = vld [vmem:[#allocation9 + $0x28] sm:$0xff]
        %v608 = vld [vmem:[#allocation9 + $0x30] sm:$0xff]
        %v609 = vld [vmem:[#allocation9 + $0x38] sm:$0xff]
        %v610 = vld [vmem:[#allocation9 + $0x40] sm:$0xff]
        %v611 = vld [vmem:[#allocation9 + $0x48] sm:$0xff]
        %v612 = vld [vmem:[#allocation9 + $0x50] sm:$0xff]
        %v613 = vld [vmem:[#allocation9 + $0x58] sm:$0xff]
        %v614 = vld [vmem:[#allocation9 + $0x60] sm:$0xff]
        %v615 = vld [vmem:[#allocation9 + $0x68] sm:$0xff]
        %v616 = vld [vmem:[#allocation9 + $0x70] sm:$0xff]
        %v617 = vld [vmem:[#allocation9 + $0x78] sm:$0xff]
        %618 = vmatprep.subr.mxu0 0.0
        %619 = vmatpush1.msra.mxu0 %v617
        %620 = vmatprep.subr.mxu0 0.0
        %621 = vmatpush1.msra.mxu0 %v616
        %622 = vmatprep.subr.mxu0 0.0
        %623 = vmatpush1.msra.mxu0 %v615
        %624 = vmatprep.subr.mxu0 0.0
        %625 = vmatpush1.msra.mxu0 %v614
        %626 = vmatprep.subr.mxu0 0.0
        %627 = vmatpush1.msra.mxu0 %v613
        %628 = vmatprep.subr.mxu0 0.0
        %629 = vmatpush1.msra.mxu0 %v612
        %630 = vmatprep.subr.mxu0 0.0
        %631 = vmatpush1.msra.mxu0 %v611
        %632 = vmatprep.subr.mxu0 0.0
        %633 = vmatpush1.msra.mxu0 %v610
        %634 = vmatprep.subr.mxu0 0.0
        %635 = vmatpush1.msra.mxu0 %v609
        %636 = vmatprep.subr.mxu0 0.0
        %637 = vmatpush1.msra.mxu0 %v608
        %638 = vmatprep.subr.mxu0 0.0
        %639 = vmatpush1.msra.mxu0 %v607
        %640 = vmatprep.subr.mxu0 0.0
        %641 = vmatpush1.msra.mxu0 %v606
        %642 = vmatprep.subr.mxu0 0.0
        %643 = vmatpush1.msra.mxu0 %v605
        %644 = vmatprep.subr.mxu0 0.0
        %645 = vmatpush1.msra.mxu0 %v604
        %646 = vmatprep.subr.mxu0 0.0
        %647 = vmatpush1.msra.mxu0 %v603
        %648 = vmatprep.subr.mxu0 0.0
        %649 = vmatpush1.msra.mxu0 %v602
        %650 = vmatprep.subr.mxu0 0.0
        %651 = vmatpush2.msra.mxu0 0.0
        %652 = vmatprep.subr.mxu0 0.0
        %653 = vmatpush2.msra.mxu0 0.0
        %654 = vmatprep.subr.mxu0 0.0
        %655 = vmatpush2.msra.mxu0 0.0
        %656 = vmatprep.subr.mxu0 0.0
        %657 = vmatpush2.msra.mxu0 0.0
        %658 = vmatprep.subr.mxu0 0.0
        %659 = vmatpush2.msra.mxu0 0.0
        %660 = vmatprep.subr.mxu0 0.0
        %661 = vmatpush2.msra.mxu0 0.0
        %662 = vmatprep.subr.mxu0 0.0
        %663 = vmatpush2.msra.mxu0 0.0
        %664 = vmatprep.subr.mxu0 0.0
        %665 = vmatpush2.msra.mxu0 0.0
        %666 = vmatprep.subr.mxu0 0.0
        %667 = vmatpush2.msra.mxu0 0.0
        %668 = vmatprep.subr.mxu0 0.0
        %669 = vmatpush2.msra.mxu0 0.0
        %670 = vmatprep.subr.mxu0 0.0
        %671 = vmatpush2.msra.mxu0 0.0
        %672 = vmatprep.subr.mxu0 0.0
        %673 = vmatpush2.msra.mxu0 0.0
        %674 = vmatprep.subr.mxu0 0.0
        %675 = vmatpush2.msra.mxu0 0.0
        %676 = vmatprep.subr.mxu0 0.0
        %677 = vmatpush2.msra.mxu0 0.0
        %678 = vmatprep.subr.mxu0 0.0
        %679 = vmatpush2.msra.mxu0 0.0
        %680 = vmatprep.subr.mxu0 0.0
        %681 = vmatpush2.msra.mxu0 0.0
        %682 = vmatprep.mubr.f32.mxu0 0.0
        %683 = vmatmul.mubr.f32.gmra.mxu0 %v600
        %v684 = vpop.f32.mrf.mxu0
        %v685 = vadd.f32 0.0, %v684
        %v686 = vpop.f32.mrf.mxu0
        %687 = vdwg.mxu0
        %v688 = vadd.f32 %v601, %v685
        %689 = vst [vmem:[#allocation2] sm:$0xff] %v688
        // Predicated region
        $region69: #{tpu_custom_call.1} parent=47 // pred_check
          %p690 = pneg %p401
        $region70: #{tpu_custom_call.1} parent=47 // pred_check_branch
          %692 = sbr.rel (%p690) target = $region72
        $region71: #{tpu_custom_call.1} parent=47 // pred_region
          %v693 = vld [vmem:[#allocation2] sm:$0xff]
          %v694 = vld [vmem:[%s6] sm:$0x1]
          %v696 = vlaneseq
          %v697 = vshrl.u32 %v696, 7
          %v698 = vsub.s32 0, %v697
          %v699 = vrot.slane %v694, %v698
          %v701 = vadd.f32 %v693, %v699
          %702 = vst [vmem:[%s393] sm:$0xff] %v701
        $region72: #{tpu_custom_call.1} parent=47 // pred_fallthru
          _
        %s703 = sand.u32 %s223, 1
        %s704 = scalar_lea.sflag [#allocation5], %s703
        %s705 = sand.u32 %s223, 1
        %s706 = smul.addr %s705, 8
        %s707 = scalar_lea.vmem [#allocation11], %s706
        // Predicated region
        $region73: #{tpu_custom_call.1} parent=47 // pred_check
          %p708 = pneg %p233
        $region74: #{tpu_custom_call.1} parent=47 // pred_check_branch
          %710 = sbr.rel (%p708) target = $region76
        $region75: #{tpu_custom_call.1} parent=47 // pred_region
          %s712 = ssub.s32 128, 128
          %713 = vsyncadd %s704, %s712
          %s714 = smul.addr %s30, 128
          %s715 = scalar_lea.hbm %s7, %s714
          %s717 = sshll.u32 %s707, 4
          %s718 = int_to_ptr.vmem [resolvable:$true] %s717
          %720 = dma.vmem_to_hbm [thread:$0]  %s718, 128, %s715, %s704
        $region76: #{tpu_custom_call.1} parent=47 // pred_fallthru
          _
      $region48: #{tpu_custom_call.1} parent=5 // pred_fallthru
        _
      %p721 = scmp.le.s32.totalorder 2, %s21
      // Predicated region
      $region77: #{tpu_custom_call.1} parent=5 // pred_check
        %p722 = pneg %p721
      $region78: #{tpu_custom_call.1} parent=5 // pred_check_branch
        %724 = sbr.rel (%p722) target = $region80
      $region79: #{tpu_custom_call.1} parent=5 // pred_region
        %s725 = ssub.s32 %s21, 2
        // Predicated region
        $region81: #{tpu_custom_call.1} parent=79 // pred_check
          %p726 = pneg %p239
        $region82: #{tpu_custom_call.1} parent=79 // pred_check_branch
          %728 = sbr.rel (%p726) target = $region84
        $region83: #{tpu_custom_call.1} parent=79 // pred_region
          %s729 = sand.u32 %s224, 1
          %s730 = scalar_lea.sflag [#allocation5], %s729
          %s731 = sand.u32 %s224, 1
          %s732 = smul.addr %s731, 8
          %s733 = scalar_lea.vmem [#allocation11], %s732
          %734 = dma.done %s730, 128
        $region84: #{tpu_custom_call.1} parent=79 // pred_fallthru
          _
      $region80: #{tpu_custom_call.1} parent=5 // pred_fallthru
        _
    $region6: #{tpu_custom_call.1} parent=1 // loop_footer
      %s25 = sadd.s32 1, %s21
    $region7: #{tpu_custom_call.1} parent=1 // loop_footer_branch
      %20 = sbr.rel target = $region3
    $region8: #{tpu_custom_call.1} parent=1 // loop_exit
      _
    %735 = vsyncpa [#allocation4], 1
    %s736 = scalar_lea.sflag [#allocation4], 1
    %737 = vsyncpa %s736, 1
    %738 = vsyncpa [#allocation7], 1
    %739 = vsyncpa [#allocation10], 1
    %740 = vsyncpa [#allocation5], 1
    %s741 = scalar_lea.sflag [#allocation5], 1
    %742 = vsyncpa %s741, 1

</llo_original>
